<compile_context>
chip_gen: v7x
topology: tpu7x:2x2x1
jax: 0.10.0
libtpu: 0.0.40
codegen_flags: <defaults>
</compile_context>

<pallas_src>
import functools

import jax
import jax.numpy as jnp
from jax import lax
from jax.experimental import pallas as pl
from jax.experimental.pallas import tpu as pltpu


_LANE = 128
_VMEM_TILE_BUDGET = 12 * 1024 * 1024   # double-buffered (in tile + out tile) byte budget
_VMEM_LIMIT = 32 * 1024 * 1024         # scoped VMEM limit handed to Mosaic
_SMALL_S = 2048                        # below this, fold batch into the lane axis


def _round_down_lane(x):
    return max(_LANE, (x // _LANE) * _LANE)


def _pick_tile(requested, lanes_total, per_lane_bytes, min_steps):
    """Lane-tile: multiple of 128 (or full extent), VMEM-bounded, >= min_steps blocks."""
    ts = max(_LANE, requested)
    # Double-buffered VMEM budget: 2 * per_lane_bytes * ts <= budget.
    ts = min(ts, _round_down_lane(_VMEM_TILE_BUDGET // (2 * per_lane_bytes)))
    # Keep a handful of grid steps for v7x's two TensorCores (no-op when tiny).
    if lanes_total > 8 * _LANE:
        ts = min(ts, max(8 * _LANE, _round_down_lane(pl.cdiv(lanes_total, min_steps))))
    return lanes_total if ts >= lanes_total else _round_down_lane(ts)


def _kernel_2d(w_ref, b_ref, p_ref, o_ref):
    # w_ref: (n_feat, K) resident weight; b_ref: (n_feat, 1) resident bias
    # p_ref: (K, ts) patch tile, lane dim = batch*spatial; o_ref: (n_feat, ts)
    acc = jnp.dot(w_ref[...], p_ref[...], preferred_element_type=jnp.float32)
    o_ref[...] = jnp.maximum(acc + b_ref[...], 0.0).astype(o_ref.dtype)


def _kernel_3d(w_ref, b_ref, p_ref, o_ref):
    # p_ref: (1, K, ts) patch tile of one image; o_ref: (1, n_feat, ts)
    acc = jnp.dot(w_ref[...], p_ref[0], preferred_element_type=jnp.float32)
    o_ref[0] = jnp.maximum(acc + b_ref[...], 0.0).astype(o_ref.dtype)


def _call_folded(w_mat, b_mat, patches, n_feat, ts, cost, out_dtype):
    K, M = patches.shape
    grid = (pl.cdiv(M, ts),)
    return pl.pallas_call(
        _kernel_2d,
        out_shape=jax.ShapeDtypeStruct((n_feat, M), out_dtype),
        grid_spec=pltpu.PrefetchScalarGridSpec(
            num_scalar_prefetch=0,
            grid=grid,
            in_specs=[
                pl.BlockSpec((n_feat, K), lambda j: (0, 0)),
                pl.BlockSpec((n_feat, 1), lambda j: (0, 0)),
                pl.BlockSpec((K, ts), lambda j: (0, j)),
            ],
            out_specs=pl.BlockSpec((n_feat, ts), lambda j: (0, j)),
        ),
        compiler_params=pltpu.CompilerParams(
            dimension_semantics=("parallel",),
            vmem_limit_bytes=_VMEM_LIMIT),
        cost_estimate=cost,
    )(w_mat, b_mat, patches)


def _call_per_image(w_mat, b_mat, patches, n_feat, ts, cost, out_dtype):
    N, K, S = patches.shape
    grid = (N, pl.cdiv(S, ts))
    return pl.pallas_call(
        _kernel_3d,
        out_shape=jax.ShapeDtypeStruct((N, n_feat, S), out_dtype),
        grid_spec=pltpu.PrefetchScalarGridSpec(
            num_scalar_prefetch=0,
            grid=grid,
            in_specs=[
                pl.BlockSpec((n_feat, K), lambda n, j: (0, 0)),
                pl.BlockSpec((n_feat, 1), lambda n, j: (0, 0)),
                pl.BlockSpec((1, K, ts), lambda n, j: (n, 0, j)),
            ],
            out_specs=pl.BlockSpec((1, n_feat, ts), lambda n, j: (n, 0, j)),
        ),
        compiler_params=pltpu.CompilerParams(
            dimension_semantics=("parallel", "parallel"),
            vmem_limit_bytes=_VMEM_LIMIT),
        cost_estimate=cost,
    )(w_mat, b_mat, patches)


@functools.partial(jax.jit, static_argnames=("ts", "compute_dtype"))
def compress_unit(x, weight, bias, *, ts=8192, compute_dtype=None):
    """x: [N, 8, H, W] NCHW, weight: [n_feat, 8, 2, 2], bias: [n_feat] -> [N, n_feat, H/2, W/2]."""
    N, C, H, W = x.shape
    assert C == 8 and H % 2 == 0 and W % 2 == 0
    n_feat = weight.shape[0]
    OH, OW = H // 2, W // 2
    S = OH * OW            # spatial outputs per image
    K = C * 2 * 2          # 32: reduction dim ordered (c, kh, kw)
    M = N * S

    p_dtype = x.dtype if compute_dtype is None else jnp.dtype(compute_dtype)
    w_mat = weight.reshape(n_feat, K).astype(p_dtype)   # matches (c, kh, kw) patch order
    b_mat = bias.reshape(n_feat, 1).astype(jnp.float32)

    in_bytes = jnp.dtype(p_dtype).itemsize
    out_bytes = jnp.dtype(x.dtype).itemsize
    per_lane_bytes = K * in_bytes + n_feat * out_bytes
    cost = pl.CostEstimate(
        flops=2 * M * K * n_feat,
        transcendentals=0,
        bytes_accessed=in_bytes * (M * K + K * n_feat) + out_bytes * M * n_feat + 4 * n_feat,
    )

    # One XLA pass over x: split H->(OH,2), W->(OW,2), move (c,kh,kw) into the reduction dim.
    # TODO(synk): fold this patch extraction into the kernel once a stride-2 lane
    # deinterleave lowers cleanly in Mosaic (cuts input HBM traffic ~3x -> 1x).
    xv = x.reshape(N, C, OH, 2, OW, 2)

    if S < _SMALL_S:
        # Small images: fold batch into the lane axis -> dense 128-lane tiles, 1-D grid.
        patches = xv.transpose(1, 3, 5, 0, 2, 4).reshape(K, M).astype(p_dtype)
        ts_m = _pick_tile(ts, M, per_lane_bytes, min_steps=8)
        out = _call_folded(w_mat, b_mat, patches, n_feat, ts_m, cost, x.dtype)
        # (n_feat, N*S) -> NCHW (output is small in this regime, transpose is cheap).
        return out.reshape(n_feat, N, OH, OW).transpose(1, 0, 2, 3)

    # Large images: one image per grid row so [N, n_feat, S] reshapes for free to NCHW.
    patches = xv.transpose(0, 1, 3, 5, 2, 4).reshape(N, K, S).astype(p_dtype)
    ts_s = _pick_tile(ts, S, per_lane_bytes, min_steps=pl.cdiv(8, N))
    out = _call_per_image(w_mat, b_mat, patches, n_feat, ts_s, cost, x.dtype)
    return out.reshape(N, n_feat, OH, OW)


def _reference(x, weight, bias):
    y = lax.conv_general_dilated(
        x, weight, window_strides=(2, 2), padding="VALID",
        dimension_numbers=("NCHW", "OIHW", "NCHW"))
    return jnp.maximum(y + bias.reshape(1, -1, 1, 1), 0.0)


if __name__ == "__main__":
    key = jax.random.PRNGKey(0)
    k_x, k_w, k_b = jax.random.split(key, 3)

    n_feat = 32
    # Input: batch=2, channels=8 (fixed by the module), spatial=16.
    x = jax.random.normal(k_x, (2, 8, 16, 16), dtype=jnp.float32)
    # Deterministic synthetic parameters (shapes from nn.Conv2d(8, n_feat, 2, 2)).
    weight = jax.random.normal(k_w, (n_feat, 8, 2, 2), dtype=jnp.float32) * 0.1
    bias = jax.random.normal(k_b, (n_feat,), dtype=jnp.float32) * 0.1

    # Small-S path (batch folded into lanes) — the demo shape.
    out = jax.block_until_ready(compress_unit(x, weight, bias))
    ref = jax.block_until_ready(_reference(x, weight, bias))
    assert out.shape == ref.shape == (2, n_feat, 8, 8)
    assert jnp.allclose(out, ref, atol=1e-4, rtol=1e-4)

    # Large-S path (per-image grid, tiled lanes) — exercise it once as well.
    x_big = jax.random.normal(k_x, (2, 8, 128, 128), dtype=jnp.float32)
    out_big = jax.block_until_ready(compress_unit(x_big, weight, bias))
    ref_big = jax.block_until_ready(_reference(x_big, weight, bias))
    assert out_big.shape == ref_big.shape == (2, n_feat, 64, 64)
    assert jnp.allclose(out_big, ref_big, atol=2e-4, rtol=2e-4)

    print("KERNEL_OK")
</pallas_src>

<mosaic_0001>
module attributes {stable_mosaic.version = 11 : i64} {
  func.func @_kernel_2d(%arg0: i32, %arg1: memref<32x32xf32, #tpu.memory_space<vmem>>, %arg2: memref<32x1xf32, #tpu.memory_space<vmem>>, %arg3: memref<32x128xf32, #tpu.memory_space<vmem>>, %arg4: memref<32x128xf32, #tpu.memory_space<vmem>>) attributes {dimension_semantics = [#tpu.dimension_semantics<parallel>], iteration_bounds = array<i64: 1>, scalar_prefetch = 0 : i64, scratch_operands = 0 : i64, tpu.core_type = #tpu.core_type<tc>, window_params = [{pipeline_mode = #tpu.pipeline_mode<synchronous>, transform_indices = @transform_0, window_bounds = array<i64: 32, 32>}, {pipeline_mode = #tpu.pipeline_mode<synchronous>, transform_indices = @transform_1, window_bounds = array<i64: 32, 1>}, {transform_indices = @transform_2, window_bounds = array<i64: 32, 128>}, {transform_indices = @transform_3, window_bounds = array<i64: 32, 128>}]} {
    %c0 = arith.constant 0 : index
    %c0_0 = arith.constant 0 : index
    %0 = vector.load %arg1[%c0, %c0_0] : memref<32x32xf32, #tpu.memory_space<vmem>>, vector<32x32xf32>
    %c0_1 = arith.constant 0 : index
    %c0_2 = arith.constant 0 : index
    %1 = vector.load %arg3[%c0_1, %c0_2] : memref<32x128xf32, #tpu.memory_space<vmem>>, vector<32x128xf32>
    %cst = arith.constant dense<0.000000e+00> : vector<32x128xf32>
    %2 = tpu.matmul %0, %1, %cst {dimension_numbers = #tpu.dot_dimension_numbers<[1], [0], [0], [1], [0, 0, 1, 1], [], []>} : vector<32x32xf32>, vector<32x128xf32>, vector<32x128xf32> -> vector<32x128xf32>
    %c0_3 = arith.constant 0 : index
    %c0_4 = arith.constant 0 : index
    %3 = vector.load %arg2[%c0_3, %c0_4] : memref<32x1xf32, #tpu.memory_space<vmem>>, vector<32x1xf32>
    %4 = vector.broadcast %3 : vector<32x1xf32> to vector<32x128xf32>
    %5 = arith.addf %2, %4 : vector<32x128xf32>
    %cst_5 = arith.constant 0.000000e+00 : f32
    %6 = vector.broadcast %cst_5 : f32 to vector<32x128xf32>
    %7 = arith.maximumf %5, %6 : vector<32x128xf32>
    %c0_6 = arith.constant 0 : index
    %c0_7 = arith.constant 0 : index
    %8 = vector.load %arg4[%c0_6, %c0_7] : memref<32x128xf32, #tpu.memory_space<vmem>>, vector<32x128xf32>
    tpu.vector_store %arg4[%c0_6, %c0_7], %7 {strides = array<i32>} : memref<32x128xf32, #tpu.memory_space<vmem>>, vector<32x128xf32>,
    return
  }
  func.func @transform_0(%arg0: i32) -> (i32, i32) {
    %c0_i32 = arith.constant 0 : i32
    %c0_i32_0 = arith.constant 0 : i32
    %c0_i32_1 = arith.constant 0 : i32
    return %c0_i32, %c0_i32_0 : i32, i32
  }
  func.func @transform_1(%arg0: i32) -> (i32, i32) {
    %c0_i32 = arith.constant 0 : i32
    %c0_i32_0 = arith.constant 0 : i32
    %c0_i32_1 = arith.constant 0 : i32
    return %c0_i32, %c0_i32_0 : i32, i32
  }
  func.func @transform_2(%arg0: i32) -> (i32, i32) {
    %c0_i32 = arith.constant 0 : i32
    %c0_i32_0 = arith.constant 0 : i32
    return %c0_i32, %arg0 : i32, i32
  }
  func.func @transform_3(%arg0: i32) -> (i32, i32) {
    %c0_i32 = arith.constant 0 : i32
    %c0_i32_0 = arith.constant 0 : i32
    return %c0_i32, %arg0 : i32, i32
  }
}

</mosaic_0001>

<llo_original>
// kernel: compress_unit.1
$region0: #{compress_unit.1}
  #allocation0 [shape = 'u32[]', space=smem, size = 0x4, offset = 0x4, fixed_abs, tag = 'smem constant byte address 0x4 - core index']
  #allocation1 [shape = 'u32[144,128]{1,0:T(1,128)}', space=vmem, size = 0x12000, scoped, tag = 'internal scratch']
  %s0 = inlined_call_operand.vmem [shape: f32[32,32], index: 0, kind: input, shape index: {}]
  %s1 = inlined_call_operand.vmem [shape: f32[32,1], index: 1, kind: input, shape index: {}]
  %s2 = inlined_call_operand.vmem [shape: f32[32,128], index: 2, kind: input, shape index: {}]
  %s3 = inlined_call_operand.vmem [shape: f32[32,128], index: 3, kind: output, shape index: {}]
  %s4 = sld [smem:[#allocation0]]
  $region22: #{compress_unit.1} parent=0
    _
  %s6 = ssub.s32 1, %s4
  %s7 = scalar_select 0, %s6, %s4
  // Predicated region
  $region2: #{compress_unit.1} parent=0 // pred_check
    _
  $region3: #{compress_unit.1} parent=0 // pred_check_branch
    %9 = sbr.rel (0) target = $region5
  $region4: #{compress_unit.1} parent=0 // pred_region
    _
  $region5: #{compress_unit.1} parent=0 // pred_fallthru
    _
  // Predicated region
  $region6: #{compress_unit.1} parent=0 // pred_check
    _
  $region7: #{compress_unit.1} parent=0 // pred_check_branch
    %11 = sbr.rel (0) target = $region9
  $region8: #{compress_unit.1} parent=0 // pred_region
    _
  $region9: #{compress_unit.1} parent=0 // pred_fallthru
    _
  // Predicated region
  $region10: #{compress_unit.1} parent=0 // pred_check
    _
  $region11: #{compress_unit.1} parent=0 // pred_check_branch
    %13 = sbr.rel (0) target = $region13
  $region12: #{compress_unit.1} parent=0 // pred_region
    _
  $region13: #{compress_unit.1} parent=0 // pred_fallthru
    _
  %v14 = vld [vmem:[%s0] sm:$0xff]
  %v15 = vld [vmem:[%s0 + $0x8] sm:$0xff]
  %v16 = vld [vmem:[%s0 + $0x10] sm:$0xff]
  %v17 = vld [vmem:[%s0 + $0x18] sm:$0xff]
  %v18 = vld [vmem:[%s2] sm:$0xff]
  %v19 = vld [vmem:[%s2 + $0x8] sm:$0xff]
  %v20 = vld [vmem:[%s2 + $0x10] sm:$0xff]
  %v21 = vld [vmem:[%s2 + $0x18] sm:$0xff]
  %v22 = vld [vmem:[%s1] sm:$0xff]
  %v23 = vld [vmem:[%s1 + $0x8] sm:$0xff]
  %v24 = vld [vmem:[%s1 + $0x10] sm:$0xff]
  %v25 = vld [vmem:[%s1 + $0x18] sm:$0xff]
  %27 = vset.pattern.permute.xlu0 0
  %28 = vperm.xlu0 %27, %v22
  %v29 = vpop.permute.xlu0 %28
  %32 = vset.pattern.permute.xlu0 0
  %33 = vperm.xlu0 %32, %v23
  %v34 = vpop.permute.xlu0 %33
  %37 = vset.pattern.permute.xlu0 0
  %38 = vperm.xlu0 %37, %v24
  %v39 = vpop.permute.xlu0 %38
  %42 = vset.pattern.permute.xlu0 0
  %43 = vperm.xlu0 %42, %v25
  %v44 = vpop.permute.xlu0 %43
  %vm46 = vcmask 261120
  %v48 = vsel %vm46, %v14, 0
  %v51 = vsel %vm46, %v15, 0
  %v54 = vsel %vm46, %v16, 0
  %v57 = vsel %vm46, %v17, 0
  %59 = vmatprep.subr.mxu0 0.0
  %60 = vmatpush1.msra.mxu0 %v18
  %61 = vmatprep.subr.mxu0 0.0
  %62 = vmatpush1.msra.mxu0 %v19
  %63 = vmatprep.subr.mxu0 0.0
  %64 = vmatpush1.msra.mxu0 %v20
  %65 = vmatprep.subr.mxu0 0.0
  %66 = vmatpush1.msra.mxu0 %v21
  %67 = vmatprep.subr.mxu0 0.0
  %68 = vmatpush1.msra.mxu0 0.0
  %69 = vmatprep.subr.mxu0 0.0
  %70 = vmatpush1.msra.mxu0 0.0
  %71 = vmatprep.subr.mxu0 0.0
  %72 = vmatpush1.msra.mxu0 0.0
  %73 = vmatprep.subr.mxu0 0.0
  %74 = vmatpush1.msra.mxu0 0.0
  %75 = vmatprep.subr.mxu0 0.0
  %76 = vmatpush1.msra.mxu0 0.0
  %77 = vmatprep.subr.mxu0 0.0
  %78 = vmatpush1.msra.mxu0 0.0
  %79 = vmatprep.subr.mxu0 0.0
  %80 = vmatpush1.msra.mxu0 0.0
  %81 = vmatprep.subr.mxu0 0.0
  %82 = vmatpush1.msra.mxu0 0.0
  %83 = vmatprep.subr.mxu0 0.0
  %84 = vmatpush1.msra.mxu0 0.0
  %85 = vmatprep.subr.mxu0 0.0
  %86 = vmatpush1.msra.mxu0 0.0
  %87 = vmatprep.subr.mxu0 0.0
  %88 = vmatpush1.msra.mxu0 0.0
  %89 = vmatprep.subr.mxu0 0.0
  %90 = vmatpush1.msra.mxu0 0.0
  %91 = vmatprep.subr.mxu0 0.0
  %92 = vmatpush1.msra.mxu0 0.0
  %93 = vmatprep.subr.mxu0 0.0
  %94 = vmatpush1.msra.mxu0 0.0
  %95 = vmatprep.subr.mxu0 0.0
  %96 = vmatpush1.msra.mxu0 0.0
  %97 = vmatprep.subr.mxu0 0.0
  %98 = vmatpush1.msra.mxu0 0.0
  %99 = vmatprep.subr.mxu0 0.0
  %100 = vmatpush1.msra.mxu0 0.0
  %101 = vmatprep.subr.mxu0 0.0
  %102 = vmatpush1.msra.mxu0 0.0
  %103 = vmatprep.subr.mxu0 0.0
  %104 = vmatpush1.msra.mxu0 0.0
  %105 = vmatprep.subr.mxu0 0.0
  %106 = vmatpush1.msra.mxu0 0.0
  %107 = vmatprep.subr.mxu0 0.0
  %108 = vmatpush1.msra.mxu0 0.0
  %109 = vmatprep.subr.mxu0 0.0
  %110 = vmatpush1.msra.mxu0 0.0
  %111 = vmatprep.subr.mxu0 0.0
  %112 = vmatpush1.msra.mxu0 0.0
  %113 = vmatprep.subr.mxu0 0.0
  %114 = vmatpush1.msra.mxu0 0.0
  %115 = vmatprep.subr.mxu0 0.0
  %116 = vmatpush1.msra.mxu0 0.0
  %117 = vmatprep.subr.mxu0 0.0
  %118 = vmatpush1.msra.mxu0 0.0
  %119 = vmatprep.subr.mxu0 0.0
  %120 = vmatpush1.msra.mxu0 0.0
  %121 = vmatprep.subr.mxu0 0.0
  %122 = vmatpush1.msra.mxu0 0.0
  %123 = vmatprep.mubr.f32.mxu0 0.0
  %124 = vmatmul.mubr.f32.gmra.mrb[0].mxu0 %v48
  %v125 = vpop.f32.mrb[0].mxu0
  %v126 = vadd.f32 %v29, %v125
  %v127 = vpop.f32.mrb[0].mxu0
  %128 = vmatprep.mubr.f32.mxu0 0.0
  %129 = vmatmul.mubr.f32.gmra.mrb[0].mxu0 %v51
  %v130 = vpop.f32.mrb[0].mxu0
  %v131 = vadd.f32 %v34, %v130
  %v132 = vpop.f32.mrb[0].mxu0
  %133 = vmatprep.mubr.f32.mxu0 0.0
  %134 = vmatmul.mubr.f32.gmra.mrb[0].mxu0 %v54
  %v135 = vpop.f32.mrb[0].mxu0
  %v136 = vadd.f32 %v39, %v135
  %v137 = vpop.f32.mrb[0].mxu0
  %138 = vmatprep.mubr.f32.mxu0 0.0
  %139 = vmatmul.mubr.f32.gmra.mrb[0].mxu0 %v57
  %v140 = vpop.f32.mrb[0].mxu0
  %v141 = vadd.f32 %v44, %v140
  %v142 = vpop.f32.mrb[0].mxu0
  %143 = vdwg.mxu0
  %v144 = vmax.f32 %v126, 0.0
  %v145 = vmax.f32 %v131, 0.0
  %v146 = vmax.f32 %v136, 0.0
  %v147 = vmax.f32 %v141, 0.0
  %148 = vst [vmem:[%s3] sm:$0xff] %v144
  %149 = vst [vmem:[%s3 + $0x8] sm:$0xff] %v145
  %150 = vst [vmem:[%s3 + $0x10] sm:$0xff] %v146
  %151 = vst [vmem:[%s3 + $0x18] sm:$0xff] %v147
  // Predicated region
  $region14: #{compress_unit.1} parent=0 // pred_check
    _
  $region15: #{compress_unit.1} parent=0 // pred_check_branch
    %153 = sbr.rel (0) target = $region17
  $region16: #{compress_unit.1} parent=0 // pred_region
    _
  $region17: #{compress_unit.1} parent=0 // pred_fallthru
    _
  // Predicated region
  $region18: #{compress_unit.1} parent=0 // pred_check
    _
  $region19: #{compress_unit.1} parent=0 // pred_check_branch
    %155 = sbr.rel (0) target = $region21
  $region20: #{compress_unit.1} parent=0 // pred_region
    _
  $region21: #{compress_unit.1} parent=0 // pred_fallthru
    _

</llo_original>
